<compile_context>
chip_gen: v5e
topology: v5e:2x2
jax: 0.10.0
libtpu: 0.0.40
codegen_flags: <defaults>
</compile_context>

<pallas_src>
import functools

import jax
import jax.numpy as jnp
from jax.experimental import pallas as pl
from jax.experimental.pallas import tpu as pltpu


def _conv_matmul_kernel(slab_ref, w_ref, b_ref, o_ref):
    # slab_ref: (1, K*K*Cin, Ho*Wo)   im2col patch slab for one batch element
    # w_ref   : (Cout, K*K*Cin)       resident collapsed weights (constant index_map)
    # b_ref   : (Cout, 1)             bias column (broadcast over lanes)
    # o_ref   : (1, Cout, Ho*Wo)      lane-dense output slab
    acc = jnp.dot(w_ref[...], slab_ref[0], preferred_element_type=jnp.float32)
    o_ref[0] = (acc + b_ref[...]).astype(o_ref.dtype)


@functools.partial(jax.jit, static_argnames="kernel_size")
def single_conv2d_block(x_nchw, weight_oikk, bias_o, kernel_size):
    """Conv2d(in, out, k, stride=1, padding=(k-1)//2) — same forward semantics as the
    PyTorch module. x_nchw: (N, Cin, H, W) -> (N, Cout, Ho, Wo)."""
    K = int(kernel_size)
    pad = (K - 1) // 2
    N, Cin, H, W = x_nchw.shape
    Cout = weight_oikk.shape[0]
    Hp, Wp = H + 2 * pad, W + 2 * pad
    Ho, Wo = Hp - K + 1, Wp - K + 1          # == H, W for odd K ("same" conv)
    KKC = K * K * Cin
    HWo = Ho * Wo

    # ---- wrapper-side im2col glue (tap-major, channel-minor row ordering) ----
    x_pad = jnp.pad(x_nchw, ((0, 0), (0, 0), (pad, pad), (pad, pad)))
    taps = []
    for kh in range(K):
        for kw in range(K):
            taps.append(x_pad[:, :, kh:kh + Ho, kw:kw + Wo].reshape(N, Cin, HWo))
    slab = jnp.concatenate(taps, axis=1)                       # (N, KKC, HWo)

    # weights (Cout, Cin, K, K) -> (Cout, K, K, Cin) -> (Cout, KKC); matches slab rows.
    w2 = jnp.transpose(weight_oikk, (0, 2, 3, 1)).reshape(Cout, KKC)
    b2 = bias_o.reshape(Cout, 1).astype(jnp.float32)

    out_flat = pl.pallas_call(
        _conv_matmul_kernel,
        out_shape=jax.ShapeDtypeStruct((N, Cout, HWo), x_nchw.dtype),
        grid=(N,),
        in_specs=[
            # per-batch patch slab (last two dims == full extents)
            pl.BlockSpec((1, KKC, HWo), lambda n: (n, 0, 0)),
            # single resident weight tile
            pl.BlockSpec((Cout, KKC), lambda n: (0, 0)),
            # bias column
            pl.BlockSpec((Cout, 1), lambda n: (0, 0)),
        ],
        # lane-dense output: minor dim Ho*Wo (multiple of 128 at these shapes)
        out_specs=pl.BlockSpec((1, Cout, HWo), lambda n: (n, 0, 0)),
        compiler_params=pltpu.CompilerParams(
            dimension_semantics=("parallel",),
            vmem_limit_bytes=32 * 1024 * 1024,
        ),
    )(slab, w2, b2)

    # trivial minor-dim split back to NCHW spatial layout
    return out_flat.reshape(N, Cout, Ho, Wo)


if __name__ == "__main__":
    # SingleConv2DBlock(in_planes=4, out_planes=8, kernel_size=3)
    N, Cin, H, W = 2, 4, 16, 16
    Cout, K = 8, 3

    key = jax.random.PRNGKey(0)
    kx, kw, kb = jax.random.split(key, 3)
    x = jax.random.normal(kx, (N, Cin, H, W), dtype=jnp.float32)
    # PyTorch conv weight layout: (Cout, Cin, K, K)
    weight = jax.random.normal(kw, (Cout, Cin, K, K), dtype=jnp.float32) * 0.1
    bias = jax.random.normal(kb, (Cout,), dtype=jnp.float32) * 0.1

    out = single_conv2d_block(x, weight, bias, K)
    out = jax.block_until_ready(out)

    # correctness check against XLA's conv (same NCHW semantics as PyTorch)
    pad = (K - 1) // 2
    ref = jax.lax.conv_general_dilated(
        x, weight, window_strides=(1, 1), padding=[(pad, pad), (pad, pad)],
        dimension_numbers=("NCHW", "OIHW", "NCHW"),
    ) + bias.reshape(1, Cout, 1, 1)

    assert out.shape == ref.shape == (N, Cout, H, W)
    assert jnp.allclose(out, ref, rtol=1e-4, atol=1e-4)
    print("KERNEL_OK")
</pallas_src>

<mosaic_0001>
module attributes {stable_mosaic.version = 11 : i64} {
  func.func @_conv_matmul_kernel(%arg0: i32, %arg1: memref<1x36x256xf32, #tpu.memory_space<vmem>>, %arg2: memref<8x36xf32, #tpu.memory_space<vmem>>, %arg3: memref<8x1xf32, #tpu.memory_space<vmem>>, %arg4: memref<1x8x256xf32, #tpu.memory_space<vmem>>) attributes {dimension_semantics = [#tpu.dimension_semantics<parallel>], iteration_bounds = array<i64: 2>, scalar_prefetch = 0 : i64, scratch_operands = 0 : i64, tpu.core_type = #tpu.core_type<tc>, window_params = [{transform_indices = @transform_0, window_bounds = array<i64: 1, 36, 256>}, {pipeline_mode = #tpu.pipeline_mode<synchronous>, transform_indices = @transform_1, window_bounds = array<i64: 8, 36>}, {pipeline_mode = #tpu.pipeline_mode<synchronous>, transform_indices = @transform_2, window_bounds = array<i64: 8, 1>}, {transform_indices = @transform_3, window_bounds = array<i64: 1, 8, 256>}]} {
    %c0 = arith.constant 0 : index
    %c0_0 = arith.constant 0 : index
    %0 = vector.load %arg2[%c0, %c0_0] : memref<8x36xf32, #tpu.memory_space<vmem>>, vector<8x36xf32>
    %c0_1 = arith.constant 0 : index
    %c0_2 = arith.constant 0 : index
    %c0_3 = arith.constant 0 : index
    %1 = vector.load %arg1[%c0_1, %c0_2, %c0_3] : memref<1x36x256xf32, #tpu.memory_space<vmem>>, vector<1x36x256xf32>
    %2 = vector.shape_cast %1 : vector<1x36x256xf32> to vector<36x256xf32>
    %cst = arith.constant dense<0.000000e+00> : vector<8x256xf32>
    %3 = tpu.matmul %0, %2, %cst {dimension_numbers = #tpu.dot_dimension_numbers<[1], [0], [0], [1], [0, 0, 1, 1], [], []>} : vector<8x36xf32>, vector<36x256xf32>, vector<8x256xf32> -> vector<8x256xf32>
    %c0_4 = arith.constant 0 : index
    %c0_5 = arith.constant 0 : index
    %4 = vector.load %arg3[%c0_4, %c0_5] : memref<8x1xf32, #tpu.memory_space<vmem>>, vector<8x1xf32>
    %5 = vector.broadcast %4 : vector<8x1xf32> to vector<8x256xf32>
    %6 = arith.addf %3, %5 : vector<8x256xf32>
    %c0_6 = arith.constant 0 : index
    %c0_7 = arith.constant 0 : index
    %c0_8 = arith.constant 0 : index
    %7 = vector.load %arg4[%c0_6, %c0_7, %c0_8] : memref<1x8x256xf32, #tpu.memory_space<vmem>>, vector<1x8x256xf32>
    %8 = vector.shape_cast %7 : vector<1x8x256xf32> to vector<8x256xf32>
    %9 = vector.shape_cast %6 : vector<8x256xf32> to vector<1x8x256xf32>
    tpu.vector_store %arg4[%c0_6, %c0_7, %c0_8], %9 {strides = array<i32>} : memref<1x8x256xf32, #tpu.memory_space<vmem>>, vector<1x8x256xf32>,
    return
  }
  func.func @transform_0(%arg0: i32) -> (i32, i32, i32) {
    %c0_i32 = arith.constant 0 : i32
    %c0_i32_0 = arith.constant 0 : i32
    %c0_i32_1 = arith.constant 0 : i32
    return %arg0, %c0_i32, %c0_i32_0 : i32, i32, i32
  }
  func.func @transform_1(%arg0: i32) -> (i32, i32) {
    %c0_i32 = arith.constant 0 : i32
    %c0_i32_0 = arith.constant 0 : i32
    %c0_i32_1 = arith.constant 0 : i32
    return %c0_i32, %c0_i32_0 : i32, i32
  }
  func.func @transform_2(%arg0: i32) -> (i32, i32) {
    %c0_i32 = arith.constant 0 : i32
    %c0_i32_0 = arith.constant 0 : i32
    %c0_i32_1 = arith.constant 0 : i32
    return %c0_i32, %c0_i32_0 : i32, i32
  }
  func.func @transform_3(%arg0: i32) -> (i32, i32, i32) {
    %c0_i32 = arith.constant 0 : i32
    %c0_i32_0 = arith.constant 0 : i32
    %c0_i32_1 = arith.constant 0 : i32
    return %arg0, %c0_i32, %c0_i32_0 : i32, i32, i32
  }
}

</mosaic_0001>

<llo_original>
// kernel: single_conv2d_block.1
$region0: #{single_conv2d_block.1}
  #allocation0 [shape = 'u32[]', space=smem, size = 0x4, offset = 0x4, fixed_abs, tag = 'smem constant byte address 0x4 - core index']
  #allocation1 [shape = 'u32[72,128]{1,0:T(1,128)}', space=vmem, size = 0x9000, scoped, tag = 'internal scratch']
  %s0 = inlined_call_operand.vmem [shape: f32[2,36,256], index: 0, kind: input, shape index: {}]
  %s1 = inlined_call_operand.vmem [shape: f32[8,36], index: 1, kind: input, shape index: {}]
  %s2 = inlined_call_operand.vmem [shape: f32[8,1], index: 2, kind: input, shape index: {}]
  %s3 = inlined_call_operand.vmem [shape: f32[2,8,256], index: 3, kind: output, shape index: {}]
  %s4 = sld [smem:[#allocation0]]
  $region45: #{single_conv2d_block.1} parent=0
    _
  %s6 = ssub.s32 1, %s4
  %s7 = scalar_select 0, %s6, %s4
  loop: start=0, step=1, limit=4
  $region2: #{single_conv2d_block.1} parent=0 // loop_pre_header
    _
  $region3: #{single_conv2d_block.1} parent=0 // loop_header
    %s9 = sphi 0, %s13
    %p10 = scmp.ge.s32.totalorder %s9, 4
    %s19 = sphi 0, %s21
    %s22 = sphi 0, %s19
    %s23 = sphi 0, %s22
    %s39 = sphi 0, %s23
    %s43 = sphi 0, %s43
    %s45 = sphi 0, %s43
    %s46 = sphi 0, %s45
    %s60 = sphi 0, %s46
    %s64 = sphi 0, %s64
    %s66 = sphi 0, %s64
    %s67 = sphi 0, %s66
    %s81 = sphi 0, %s67
    %s87 = sphi 0, %s89
    %s90 = sphi 0, %s87
    %s91 = sphi 0, %s90
    %s107 = sphi 0, %s91
  $region4: #{single_conv2d_block.1} parent=0 // loop_header_branch
    %12 = sbr.rel (%p10) target = $region8
  $region5: #{single_conv2d_block.1} parent=0 // loop_body
    %s14 = ssub.s32 %s9, 1
    %s15 = ssub.s32 %s9, 2
    %s16 = sadd.s32 %s9, 1
    %s17 = ssub.s32 %s9, %s16
    %p18 = scmp.eq.s32.totalorder %s17, 0
    %s20 = sadd.s32 %s19, 1
    %s21 = scalar_select %p18, %s19, %s20
    %p24 = pneg %p18
    %p25 = scmp.eq.s32.totalorder %s9, 1
    %p26 = por %p24, %p25
    %p27 = scmp.ne.s32.totalorder %s19, %s22
    %p28 = scmp.eq.s32.totalorder %s9, 0
    %p29 = por %p27, %p28
    %p30 = scmp.ne.s32.totalorder %s19, %s22
    %p31 = scmp.eq.s32.totalorder %s14, 1
    %p32 = por %p30, %p31
    %p33 = scmp.ne.s32.totalorder %s22, %s23
    %p34 = scmp.eq.s32.totalorder %s14, 0
    %p35 = por %p33, %p34
    %p36 = scmp.ne.s32.totalorder %s22, %s23
    %p37 = scmp.eq.s32.totalorder %s15, 1
    %p38 = por %p36, %p37
    %p40 = scmp.ne.s32.totalorder %s23, %s39
    %p41 = scmp.eq.s32.totalorder %s15, 0
    %p42 = por %p40, %p41
    %s44 = sadd.s32 %s43, 1
    %p47 = scmp.eq.s32.totalorder %s9, 1
    %p48 = scmp.ne.s32.totalorder %s43, %s45
    %p49 = scmp.eq.s32.totalorder %s9, 0
    %p50 = por %p48, %p49
    %p51 = scmp.ne.s32.totalorder %s43, %s45
    %p52 = scmp.eq.s32.totalorder %s14, 1
    %p53 = por %p51, %p52
    %p54 = scmp.ne.s32.totalorder %s45, %s46
    %p55 = scmp.eq.s32.totalorder %s14, 0
    %p56 = por %p54, %p55
    %p57 = scmp.ne.s32.totalorder %s45, %s46
    %p58 = scmp.eq.s32.totalorder %s15, 1
    %p59 = por %p57, %p58
    %p61 = scmp.ne.s32.totalorder %s46, %s60
    %p62 = scmp.eq.s32.totalorder %s15, 0
    %p63 = por %p61, %p62
    %s65 = sadd.s32 %s64, 1
    %p68 = scmp.eq.s32.totalorder %s9, 1
    %p69 = scmp.ne.s32.totalorder %s64, %s66
    %p70 = scmp.eq.s32.totalorder %s9, 0
    %p71 = por %p69, %p70
    %p72 = scmp.ne.s32.totalorder %s64, %s66
    %p73 = scmp.eq.s32.totalorder %s14, 1
    %p74 = por %p72, %p73
    %p75 = scmp.ne.s32.totalorder %s66, %s67
    %p76 = scmp.eq.s32.totalorder %s14, 0
    %p77 = por %p75, %p76
    %p78 = scmp.ne.s32.totalorder %s66, %s67
    %p79 = scmp.eq.s32.totalorder %s15, 1
    %p80 = por %p78, %p79
    %p82 = scmp.ne.s32.totalorder %s67, %s81
    %p83 = scmp.eq.s32.totalorder %s15, 0
    %p84 = por %p82, %p83
    %s85 = ssub.s32 %s9, %s16
    %p86 = scmp.eq.s32.totalorder %s85, 0
    %s88 = sadd.s32 %s87, 1
    %s89 = scalar_select %p86, %s87, %s88
    %p92 = pneg %p86
    %p93 = scmp.eq.s32.totalorder %s9, 1
    %p94 = por %p92, %p93
    %p95 = scmp.ne.s32.totalorder %s87, %s90
    %p96 = scmp.eq.s32.totalorder %s9, 0
    %p97 = por %p95, %p96
    %p98 = scmp.ne.s32.totalorder %s87, %s90
    %p99 = scmp.eq.s32.totalorder %s14, 1
    %p100 = por %p98, %p99
    %p101 = scmp.ne.s32.totalorder %s90, %s91
    %p102 = scmp.eq.s32.totalorder %s14, 0
    %p103 = por %p101, %p102
    %p104 = scmp.ne.s32.totalorder %s90, %s91
    %p105 = scmp.eq.s32.totalorder %s15, 1
    %p106 = por %p104, %p105
    %p108 = scmp.ne.s32.totalorder %s91, %s107
    %p109 = scmp.eq.s32.totalorder %s15, 0
    %p110 = por %p108, %p109
    %p111 = scmp.le.s32.totalorder 1, %s9
    %p112 = scmp.lt.s32.totalorder %s9, 3
    %p113 = pnand %p111, %p112
    %p114 = pneg %p113
    // Predicated region
    $region9: #{single_conv2d_block.1} parent=5 // pred_check
      _
    $region10: #{single_conv2d_block.1} parent=5 // pred_check_branch
      %116 = sbr.rel (%p113) target = $region12
    $region11: #{single_conv2d_block.1} parent=5 // pred_region
      %s117 = ssub.s32 %s9, 1
      // Predicated region
      $region13: #{single_conv2d_block.1} parent=11 // pred_check
        %p118 = pneg %p56
      $region14: #{single_conv2d_block.1} parent=11 // pred_check_branch
        %120 = sbr.rel (%p118) target = $region16
      $region15: #{single_conv2d_block.1} parent=11 // pred_region
        _
      $region16: #{single_conv2d_block.1} parent=11 // pred_fallthru
        _
      // Predicated region
      $region17: #{single_conv2d_block.1} parent=11 // pred_check
        %p121 = pneg %p77
      $region18: #{single_conv2d_block.1} parent=11 // pred_check_branch
        %123 = sbr.rel (%p121) target = $region20
      $region19: #{single_conv2d_block.1} parent=11 // pred_region
        _
      $region20: #{single_conv2d_block.1} parent=11 // pred_fallthru
        _
    $region12: #{single_conv2d_block.1} parent=5 // pred_fallthru
      _
    %p124 = scmp.lt.s32.totalorder %s9, 2
    // Predicated region
    $region21: #{single_conv2d_block.1} parent=5 // pred_check
      %p125 = pneg %p124
    $region22: #{single_conv2d_block.1} parent=5 // pred_check_branch
      %127 = sbr.rel (%p125) target = $region24
    $region23: #{single_conv2d_block.1} parent=5 // pred_region
      // Predicated region
      $region25: #{single_conv2d_block.1} parent=23 // pred_check
        %p128 = pneg %p29
      $region26: #{single_conv2d_block.1} parent=23 // pred_check_branch
        %130 = sbr.rel (%p128) target = $region28
      $region27: #{single_conv2d_block.1} parent=23 // pred_region
        %p131 = scmp.lt.s32.totalorder %s9, 1
        %s132 = scalar_select %p131, %s9, 1
        %s133 = smul.addr %s132, 10
        %s134 = smul.addr %s133, 8
        %s135 = scalar_lea.vmem %s0, %s134
      $region28: #{single_conv2d_block.1} parent=23 // pred_fallthru
        _
    $region24: #{single_conv2d_block.1} parent=5 // pred_fallthru
      _
    %p136 = scmp.le.s32.totalorder 1, %s9
    %p137 = scmp.lt.s32.totalorder %s9, 3
    %p138 = pnand %p136, %p137
    %p139 = pneg %p138
    // Predicated region
    $region29: #{single_conv2d_block.1} parent=5 // pred_check
      _
    $region30: #{single_conv2d_block.1} parent=5 // pred_check_branch
      %141 = sbr.rel (%p138) target = $region32
    $region31: #{single_conv2d_block.1} parent=5 // pred_region
      %s142 = ssub.s32 %s9, 1
      %p143 = scmp.lt.s32.totalorder %s14, 1
      %s144 = scalar_select %p143, %s14, 1
      %s145 = smul.addr %s144, 10
      %s146 = smul.addr %s145, 8
      %s147 = scalar_lea.vmem %s0, %s146
      %p148 = pneg %p35
      %p149 = pneg %p32
      %p150 = pneg %p56
      %p151 = pneg %p53
      %p152 = pneg %p77
      %p153 = pneg %p74
      %p154 = pneg %p103
      %p155 = pneg %p100
      %p156 = scmp.lt.s32.totalorder %s14, 1
      %s157 = scalar_select %p156, %s14, 1
      %s158 = smul.addr %s157, 2
      %s159 = smul.addr %s158, 8
      %s160 = scalar_lea.vmem %s3, %s159
      %p161 = scmp.lt.s32.totalorder %s14, 1
      %s162 = scalar_select %p161, %s14, 1
      %s163 = smul.addr %s162, 10
      %s164 = smul.addr %s163, 8
      %s165 = scalar_lea.vmem %s0, %s164
      %p166 = scmp.lt.s32.totalorder %s14, 1
      %s167 = scalar_select %p166, %s14, 1
      %s168 = smul.addr %s167, 2
      %s169 = smul.addr %s168, 8
      %s170 = scalar_lea.vmem %s3, %s169
      %v171 = vld [vmem:[%s1] sm:$0xff]
      %v172 = vld [vmem:[%s165] sm:$0xff]
      %v173 = vld [vmem:[%s165 + $0x8] sm:$0xff]
      %v174 = vld [vmem:[%s165 + $0x10] sm:$0xff]
      %v175 = vld [vmem:[%s165 + $0x18] sm:$0xff]
      %v176 = vld [vmem:[%s165 + $0x20] sm:$0xff]
      %v177 = vld [vmem:[%s165 + $0x28] sm:$0xff]
      %v178 = vld [vmem:[%s165 + $0x30] sm:$0xff]
      %v179 = vld [vmem:[%s165 + $0x38] sm:$0xff]
      %v180 = vld [vmem:[%s165 + $0x40] sm:$0xf]
      %v181 = vld [vmem:[%s165 + $0x48] sm:$0xf]
      %v182 = vld [vmem:[%s2] sm:$0xff]
      %184 = vset.pattern.permute.xlu0 0
      %185 = vperm.xlu0 %184, %v182
      %v186 = vpop.permute.xlu0 %185
      %vm188 = vcmask 293888
      %v190 = vsel %vm188, %v171, 0
      %vm192 = vcmask 1043456
      %v194 = vsel %vm192, %v180, 0
      %v197 = vsel %vm192, %v181, 0
      %199 = vmatpush.msra.mxu0 0.0
      %200 = vmatpush.msra.mxu0 0.0
      %201 = vmatpush.msra.mxu0 0.0
      %202 = vmatpush.msra.mxu0 0.0
      %203 = vmatpush.msra.mxu0 0.0
      %204 = vmatpush.msra.mxu0 0.0
      %205 = vmatpush.msra.mxu0 0.0
      %206 = vmatpush.msra.mxu0 0.0
      %207 = vmatpush.msra.mxu0 0.0
      %208 = vmatpush.msra.mxu0 0.0
      %209 = vmatpush.msra.mxu0 0.0
      %210 = vmatpush.msra.mxu0 %v194
      %211 = vmatpush.msra.mxu0 %v178
      %212 = vmatpush.msra.mxu0 %v176
      %213 = vmatpush.msra.mxu0 %v174
      %214 = vmatpush.msra.mxu0 %v172
      %215 = vmatmul.f32.gmra.mxu0 %v190
      %v216 = vpop.f32.mrf.mxu0
      %v217 = vadd.f32 %v186, %v216
      %218 = vdwg.mxu0
      %219 = vmatpush.msra.mxu0 0.0
      %220 = vmatpush.msra.mxu0 0.0
      %221 = vmatpush.msra.mxu0 0.0
      %222 = vmatpush.msra.mxu0 0.0
      %223 = vmatpush.msra.mxu0 0.0
      %224 = vmatpush.msra.mxu0 0.0
      %225 = vmatpush.msra.mxu0 0.0
      %226 = vmatpush.msra.mxu0 0.0
      %227 = vmatpush.msra.mxu0 0.0
      %228 = vmatpush.msra.mxu0 0.0
      %229 = vmatpush.msra.mxu0 0.0
      %230 = vmatpush.msra.mxu0 %v197
      %231 = vmatpush.msra.mxu0 %v179
      %232 = vmatpush.msra.mxu0 %v177
      %233 = vmatpush.msra.mxu0 %v175
      %234 = vmatpush.msra.mxu0 %v173
      %235 = vmatmul.f32.gmra.mxu0 %v190
      %v236 = vpop.f32.mrf.mxu0
      %v237 = vadd.f32 %v186, %v236
      %238 = vdwg.mxu0
      %239 = vst [vmem:[%s170] sm:$0xff] %v217
      %240 = vst [vmem:[%s170 + $0x8] sm:$0xff] %v237
      %p241 = scmp.lt.s32.totalorder %s14, 1
      %s242 = scalar_select %p241, %s14, 1
      %s243 = smul.addr %s242, 2
      %s244 = smul.addr %s243, 8
      %s245 = scalar_lea.vmem %s3, %s244
      // Predicated region
      $region33: #{single_conv2d_block.1} parent=31 // pred_check
        %p246 = pneg %p100
      $region34: #{single_conv2d_block.1} parent=31 // pred_check_branch
        %248 = sbr.rel (%p246) target = $region36
      $region35: #{single_conv2d_block.1} parent=31 // pred_region
        _
      $region36: #{single_conv2d_block.1} parent=31 // pred_fallthru
        _
    $region32: #{single_conv2d_block.1} parent=5 // pred_fallthru
      _
    %p249 = scmp.le.s32.totalorder 2, %s9
    // Predicated region
    $region37: #{single_conv2d_block.1} parent=5 // pred_check
      %p250 = pneg %p249
    $region38: #{single_conv2d_block.1} parent=5 // pred_check_branch
      %252 = sbr.rel (%p250) target = $region40
    $region39: #{single_conv2d_block.1} parent=5 // pred_region
      %s253 = ssub.s32 %s9, 2
      // Predicated region
      $region41: #{single_conv2d_block.1} parent=39 // pred_check
        %p254 = pneg %p106
      $region42: #{single_conv2d_block.1} parent=39 // pred_check_branch
        %256 = sbr.rel (%p254) target = $region44
      $region43: #{single_conv2d_block.1} parent=39 // pred_region
        %p257 = scmp.lt.s32.totalorder %s15, 1
        %s258 = scalar_select %p257, %s15, 1
        %s259 = smul.addr %s258, 2
        %s260 = smul.addr %s259, 8
        %s261 = scalar_lea.vmem %s3, %s260
      $region44: #{single_conv2d_block.1} parent=39 // pred_fallthru
        _
    $region40: #{single_conv2d_block.1} parent=5 // pred_fallthru
      _
  $region6: #{single_conv2d_block.1} parent=0 // loop_footer
    %s13 = sadd.s32 1, %s9
  $region7: #{single_conv2d_block.1} parent=0 // loop_footer_branch
    %8 = sbr.rel target = $region3
  $region8: #{single_conv2d_block.1} parent=0 // loop_exit
    _

</llo_original>
